<compile_context>
chip_gen: v6e
topology: v6e:2x2x1
jax: 0.10.0
libtpu: 0.0.40
codegen_flags: <defaults>
</compile_context>

<pallas_src>
import math

import jax
import jax.numpy as jnp
from jax import lax
from jax.experimental import pallas as pl
from jax.experimental.pallas import tpu as pltpu


def _dot_f32_via_bf16x3(a, b):
    """~f32-accurate MXU matmul: 2-term bf16 hi/lo split, 3 bf16 passes."""
    a_hi = a.astype(jnp.bfloat16)
    a_lo = (a - a_hi.astype(jnp.float32)).astype(jnp.bfloat16)
    b_hi = b.astype(jnp.bfloat16)
    b_lo = (b - b_hi.astype(jnp.float32)).astype(jnp.bfloat16)
    out = jnp.dot(a_hi, b_hi, preferred_element_type=jnp.float32)
    out = out + jnp.dot(a_lo, b_hi, preferred_element_type=jnp.float32)
    out = out + jnp.dot(a_hi, b_lo, preferred_element_type=jnp.float32)
    return out


def _make_resblock_kernel(H, W, NBC):
    HW = H * W

    def kernel(x_ref, w1_ref, b1_ref, w2_ref, b2_ref, w3_ref, b3_ref,
               mask_ref, o_ref):
        # x_ref / o_ref : (NBC, HW)     NB images x C channels on sublanes,
        #                               flattened spatial on lanes.
        # w1_ref/w2_ref : (NBC, 9*NBC)  batch-block-diagonal 3x3 weights (f32).
        # w3_ref        : (NBC, NBC)    batch-block-diagonal 1x1 weights (f32).
        # b*_ref        : (NBC, 1)      biases, tiled over the packed images.
        # mask_ref      : (9, NBC, HW)  0/1 boundary masks, pre-broadcast.
        x = x_ref[...].astype(jnp.float32)

        def im2col(a):
            # (NBC, HW) -> (9*NBC, HW); tap t occupies rows [t*NBC, (t+1)*NBC).
            cols = []
            for t in range(9):
                dh, dw = t // 3 - 1, t % 3 - 1
                d = dh * W + dw
                if d == 0:
                    cols.append(a)  # centre tap: no shift, no boundary effect
                else:
                    # out[q] = a[q + d] where in-bounds, else exactly 0 (zero
                    # padding).  The roll is lane-only, so packed images never
                    # mix across sublanes; row / image wrap-around from the
                    # roll is replaced by 0 via jnp.where (NaN/Inf safe).
                    s = pltpu.roll(a, (-d) % HW, axis=1)
                    cols.append(jnp.where(mask_ref[t] != 0.0, s, 0.0))
            return jnp.concatenate(cols, axis=0)

        h = jnp.maximum(
            _dot_f32_via_bf16x3(w1_ref[...], im2col(x)) + b1_ref[...], 0.0)
        h = jnp.maximum(
            _dot_f32_via_bf16x3(w2_ref[...], im2col(h)) + b2_ref[...], 0.0)
        y = _dot_f32_via_bf16x3(w3_ref[...], h) + b3_ref[...]

        # residual add on the unpadded input (already in the right layout)
        o_ref[...] = (y + x).astype(o_ref.dtype)

    return kernel


def _pick_packing(N, C):
    """Largest divisor NB of N such that NB*C <= 8 (fill the sublane axis)."""
    if C >= 8:
        return 1
    best = 1
    for nb in range(1, N + 1):
        if N % nb == 0 and nb * C <= 8:
            best = nb
    return best


def resblock_pallas(x_nchw, params):
    """x_nchw: (N, C, H, W) float32.  params: torch-layout (OIHW) weights/biases."""
    w1, b1, w2, b2, w3, b3 = params
    N, C, H, W = x_nchw.shape
    HW = H * W
    NB = _pick_packing(N, C)
    NBC = NB * C
    G = N // NB

    # NCHW -> (G, NB*C, H*W): pure reshape (sublane batch packing), no transpose.
    x3 = x_nchw.reshape(G, NBC, HW)

    # Batch-block-diagonal weights so one dot serves all packed images:
    #   w_big[n*C+co, t*NBC + m*C + ci] = w[co, ci, t//3, t%3] * (n == m)
    eye = jnp.eye(NB, dtype=jnp.float32)

    def pack3x3(w):
        blocks = [jnp.kron(eye, w[:, :, t // 3, t % 3]) for t in range(9)]
        return jnp.concatenate(blocks, axis=1)            # (NBC, 9*NBC)

    def pack1x1(w):
        return jnp.kron(eye, w[:, :, 0, 0])                # (NBC, NBC)

    def packb(b):
        return jnp.tile(b, NB).reshape(NBC, 1)

    w1b, w2b, w3b = pack3x3(w1), pack3x3(w2), pack1x1(w3)
    b1b, b2b, b3b = packb(b1), packb(b2), packb(b3)

    # 0/1 boundary masks per tap over the flattened H*W lane axis, pre-broadcast
    # to the packed sublane count (no in-kernel sublane broadcasts).
    q = jnp.arange(HW, dtype=jnp.int32)
    hh, ww = q // W, q % W
    rows = []
    for t in range(9):
        dh, dw = t // 3 - 1, t % 3 - 1
        rows.append((hh + dh >= 0) & (hh + dh < H)
                    & (ww + dw >= 0) & (ww + dw < W))
    masks = jnp.broadcast_to(
        jnp.stack(rows).astype(jnp.float32)[:, None, :], (9, NBC, HW))

    # Advisory cost estimate (issued MXU work incl. the 3 bf16 passes + VPU/XLU).
    mxu_flops = G * 3 * 2 * HW * (2 * NBC * 9 * NBC + NBC * NBC)
    vpu_flops = G * 60 * NBC * HW
    bytes_accessed = 4 * (2 * N * C * HW + 2 * NBC * 9 * NBC + NBC * NBC
                          + 3 * NBC + 9 * NBC * HW)

    out = pl.pallas_call(
        _make_resblock_kernel(H, W, NBC),
        out_shape=jax.ShapeDtypeStruct((G, NBC, HW), x_nchw.dtype),
        grid=(G,),
        in_specs=[
            pl.BlockSpec((None, NBC, HW), lambda g: (g, 0, 0)),   # x per step
            pl.BlockSpec((NBC, 9 * NBC), lambda g: (0, 0)),       # w1
            pl.BlockSpec((NBC, 1), lambda g: (0, 0)),             # b1
            pl.BlockSpec((NBC, 9 * NBC), lambda g: (0, 0)),       # w2
            pl.BlockSpec((NBC, 1), lambda g: (0, 0)),             # b2
            pl.BlockSpec((NBC, NBC), lambda g: (0, 0)),           # w3
            pl.BlockSpec((NBC, 1), lambda g: (0, 0)),             # b3
            pl.BlockSpec((9, NBC, HW), lambda g: (0, 0, 0)),      # masks
        ],
        out_specs=pl.BlockSpec((None, NBC, HW), lambda g: (g, 0, 0)),
        compiler_params=pltpu.CompilerParams(
            dimension_semantics=("parallel",),
            vmem_limit_bytes=32 * 1024 * 1024,
        ),
        cost_estimate=pl.CostEstimate(
            flops=mxu_flops + vpu_flops, transcendentals=0,
            bytes_accessed=bytes_accessed),
    )(x3, w1b, b1b, w2b, b2b, w3b, b3b, masks)

    return out.reshape(N, C, H, W)


def resblock_ref(x, params):
    """Pure-JAX reference matching torch semantics (NCHW / OIHW), full precision."""
    w1, b1, w2, b2, w3, b3 = params

    def conv(inp, w, b, pad):
        y = lax.conv_general_dilated(
            inp, w, window_strides=(1, 1), padding=pad,
            dimension_numbers=("NCHW", "OIHW", "NCHW"),
            precision=lax.Precision.HIGHEST)
        return y + b[None, :, None, None]

    h = jax.nn.relu(conv(x, w1, b1, ((1, 1), (1, 1))))
    h = jax.nn.relu(conv(h, w2, b2, ((1, 1), (1, 1))))
    h = conv(h, w3, b3, ((0, 0), (0, 0)))
    return h + x


def init_params(key, channels):
    """Deterministic init matching torch Conv2d default (kaiming-uniform-ish)."""
    ks = jax.random.split(key, 6)
    C = channels

    def uconv(k, shape, fan_in):
        bound = 1.0 / math.sqrt(fan_in)
        return jax.random.uniform(k, shape, jnp.float32, -bound, bound)

    w1 = uconv(ks[0], (C, C, 3, 3), C * 9)
    b1 = uconv(ks[1], (C,), C * 9)
    w2 = uconv(ks[2], (C, C, 3, 3), C * 9)
    b2 = uconv(ks[3], (C,), C * 9)
    w3 = uconv(ks[4], (C, C, 1, 1), C)
    b3 = uconv(ks[5], (C,), C)
    return (w1, b1, w2, b2, w3, b3)


if __name__ == "__main__":
    key = jax.random.PRNGKey(0)
    k_x, k_p = jax.random.split(key)

    N, C, H, W = 2, 4, 16, 16
    x = jax.random.normal(k_x, (N, C, H, W), jnp.float32)
    params = init_params(k_p, C)

    out = jax.block_until_ready(resblock_pallas(x, params))
    ref = resblock_ref(x, params)

    assert out.shape == (N, C, H, W)
    err = float(jnp.max(jnp.abs(out - ref)))
    # The bf16x3 split keeps the MXU path at ~f32 accuracy; 1e-3 leaves margin.
    assert err < 1e-3, err
    print("KERNEL_OK")
</pallas_src>

<mosaic_0001>
module attributes {stable_mosaic.version = 11 : i64} {
  func.func @kernel(%arg0: i32, %arg1: memref<1x8x256xf32, #tpu.memory_space<vmem>>, %arg2: memref<8x72xf32, #tpu.memory_space<vmem>>, %arg3: memref<8x1xf32, #tpu.memory_space<vmem>>, %arg4: memref<8x72xf32, #tpu.memory_space<vmem>>, %arg5: memref<8x1xf32, #tpu.memory_space<vmem>>, %arg6: memref<8x8xf32, #tpu.memory_space<vmem>>, %arg7: memref<8x1xf32, #tpu.memory_space<vmem>>, %arg8: memref<9x8x256xf32, #tpu.memory_space<vmem>>, %arg9: memref<1x8x256xf32, #tpu.memory_space<vmem>>) attributes {dimension_semantics = [#tpu.dimension_semantics<parallel>], iteration_bounds = array<i64: 1>, scalar_prefetch = 0 : i64, scratch_operands = 0 : i64, tpu.core_type = #tpu.core_type<tc>, window_params = [{transform_indices = @transform_0, window_bounds = array<i64: 1, 8, 256>}, {pipeline_mode = #tpu.pipeline_mode<synchronous>, transform_indices = @transform_1, window_bounds = array<i64: 8, 72>}, {pipeline_mode = #tpu.pipeline_mode<synchronous>, transform_indices = @transform_2, window_bounds = array<i64: 8, 1>}, {pipeline_mode = #tpu.pipeline_mode<synchronous>, transform_indices = @transform_3, window_bounds = array<i64: 8, 72>}, {pipeline_mode = #tpu.pipeline_mode<synchronous>, transform_indices = @transform_4, window_bounds = array<i64: 8, 1>}, {pipeline_mode = #tpu.pipeline_mode<synchronous>, transform_indices = @transform_5, window_bounds = array<i64: 8, 8>}, {pipeline_mode = #tpu.pipeline_mode<synchronous>, transform_indices = @transform_6, window_bounds = array<i64: 8, 1>}, {pipeline_mode = #tpu.pipeline_mode<synchronous>, transform_indices = @transform_7, window_bounds = array<i64: 9, 8, 256>}, {transform_indices = @transform_8, window_bounds = array<i64: 1, 8, 256>}]} {
    %c0 = arith.constant 0 : index
    %c0_0 = arith.constant 0 : index
    %c0_1 = arith.constant 0 : index
    %0 = vector.load %arg1[%c0, %c0_0, %c0_1] : memref<1x8x256xf32, #tpu.memory_space<vmem>>, vector<1x8x256xf32>
    %1 = vector.shape_cast %0 : vector<1x8x256xf32> to vector<8x256xf32>
    %c0_2 = arith.constant 0 : index
    %c0_3 = arith.constant 0 : index
    %2 = vector.load %arg2[%c0_2, %c0_3] : memref<8x72xf32, #tpu.memory_space<vmem>>, vector<8x72xf32>
    %c17_i32 = arith.constant 17 : i32
    %3 = tpu.dynamic_rotate %1 by %c17_i32 dim 1 : vector<8x256xf32>, i32 -> vector<8x256xf32>
    %c0_4 = arith.constant 0 : index
    %c0_5 = arith.constant 0 : index
    %c0_6 = arith.constant 0 : index
    %4 = vector.load %arg8[%c0_4, %c0_5, %c0_6] : memref<9x8x256xf32, #tpu.memory_space<vmem>>, vector<1x8x256xf32>
    %5 = vector.shape_cast %4 : vector<1x8x256xf32> to vector<8x256xf32>
    %cst = arith.constant 0.000000e+00 : f32
    %6 = vector.broadcast %cst : f32 to vector<8x256xf32>
    %7 = arith.cmpf one, %5, %6 : vector<8x256xf32>
    %cst_7 = arith.constant 0.000000e+00 : f32
    %8 = vector.broadcast %cst_7 : f32 to vector<8x256xf32>
    %9 = arith.select %7, %3, %8 : vector<8x256xi1>, vector<8x256xf32>
    %c16_i32 = arith.constant 16 : i32
    %10 = tpu.dynamic_rotate %1 by %c16_i32 dim 1 : vector<8x256xf32>, i32 -> vector<8x256xf32>
    %c1 = arith.constant 1 : index
    %c0_8 = arith.constant 0 : index
    %c0_9 = arith.constant 0 : index
    %11 = vector.load %arg8[%c1, %c0_8, %c0_9] : memref<9x8x256xf32, #tpu.memory_space<vmem>>, vector<1x8x256xf32>
    %12 = vector.shape_cast %11 : vector<1x8x256xf32> to vector<8x256xf32>
    %cst_10 = arith.constant 0.000000e+00 : f32
    %13 = vector.broadcast %cst_10 : f32 to vector<8x256xf32>
    %14 = arith.cmpf one, %12, %13 : vector<8x256xf32>
    %cst_11 = arith.constant 0.000000e+00 : f32
    %15 = vector.broadcast %cst_11 : f32 to vector<8x256xf32>
    %16 = arith.select %14, %10, %15 : vector<8x256xi1>, vector<8x256xf32>
    %c15_i32 = arith.constant 15 : i32
    %17 = tpu.dynamic_rotate %1 by %c15_i32 dim 1 : vector<8x256xf32>, i32 -> vector<8x256xf32>
    %c2 = arith.constant 2 : index
    %c0_12 = arith.constant 0 : index
    %c0_13 = arith.constant 0 : index
    %18 = vector.load %arg8[%c2, %c0_12, %c0_13] : memref<9x8x256xf32, #tpu.memory_space<vmem>>, vector<1x8x256xf32>
    %19 = vector.shape_cast %18 : vector<1x8x256xf32> to vector<8x256xf32>
    %cst_14 = arith.constant 0.000000e+00 : f32
    %20 = vector.broadcast %cst_14 : f32 to vector<8x256xf32>
    %21 = arith.cmpf one, %19, %20 : vector<8x256xf32>
    %cst_15 = arith.constant 0.000000e+00 : f32
    %22 = vector.broadcast %cst_15 : f32 to vector<8x256xf32>
    %23 = arith.select %21, %17, %22 : vector<8x256xi1>, vector<8x256xf32>
    %c1_i32 = arith.constant 1 : i32
    %24 = tpu.dynamic_rotate %1 by %c1_i32 dim 1 : vector<8x256xf32>, i32 -> vector<8x256xf32>
    %c3 = arith.constant 3 : index
    %c0_16 = arith.constant 0 : index
    %c0_17 = arith.constant 0 : index
    %25 = vector.load %arg8[%c3, %c0_16, %c0_17] : memref<9x8x256xf32, #tpu.memory_space<vmem>>, vector<1x8x256xf32>
    %26 = vector.shape_cast %25 : vector<1x8x256xf32> to vector<8x256xf32>
    %cst_18 = arith.constant 0.000000e+00 : f32
    %27 = vector.broadcast %cst_18 : f32 to vector<8x256xf32>
    %28 = arith.cmpf one, %26, %27 : vector<8x256xf32>
    %cst_19 = arith.constant 0.000000e+00 : f32
    %29 = vector.broadcast %cst_19 : f32 to vector<8x256xf32>
    %30 = arith.select %28, %24, %29 : vector<8x256xi1>, vector<8x256xf32>
    %c255_i32 = arith.constant 255 : i32
    %31 = tpu.dynamic_rotate %1 by %c255_i32 dim 1 : vector<8x256xf32>, i32 -> vector<8x256xf32>
    %c5 = arith.constant 5 : index
    %c0_20 = arith.constant 0 : index
    %c0_21 = arith.constant 0 : index
    %32 = vector.load %arg8[%c5, %c0_20, %c0_21] : memref<9x8x256xf32, #tpu.memory_space<vmem>>, vector<1x8x256xf32>
    %33 = vector.shape_cast %32 : vector<1x8x256xf32> to vector<8x256xf32>
    %cst_22 = arith.constant 0.000000e+00 : f32
    %34 = vector.broadcast %cst_22 : f32 to vector<8x256xf32>
    %35 = arith.cmpf one, %33, %34 : vector<8x256xf32>
    %cst_23 = arith.constant 0.000000e+00 : f32
    %36 = vector.broadcast %cst_23 : f32 to vector<8x256xf32>
    %37 = arith.select %35, %31, %36 : vector<8x256xi1>, vector<8x256xf32>
    %c241_i32 = arith.constant 241 : i32
    %38 = tpu.dynamic_rotate %1 by %c241_i32 dim 1 : vector<8x256xf32>, i32 -> vector<8x256xf32>
    %c6 = arith.constant 6 : index
    %c0_24 = arith.constant 0 : index
    %c0_25 = arith.constant 0 : index
    %39 = vector.load %arg8[%c6, %c0_24, %c0_25] : memref<9x8x256xf32, #tpu.memory_space<vmem>>, vector<1x8x256xf32>
    %40 = vector.shape_cast %39 : vector<1x8x256xf32> to vector<8x256xf32>
    %cst_26 = arith.constant 0.000000e+00 : f32
    %41 = vector.broadcast %cst_26 : f32 to vector<8x256xf32>
    %42 = arith.cmpf one, %40, %41 : vector<8x256xf32>
    %cst_27 = arith.constant 0.000000e+00 : f32
    %43 = vector.broadcast %cst_27 : f32 to vector<8x256xf32>
    %44 = arith.select %42, %38, %43 : vector<8x256xi1>, vector<8x256xf32>
    %c240_i32 = arith.constant 240 : i32
    %45 = tpu.dynamic_rotate %1 by %c240_i32 dim 1 : vector<8x256xf32>, i32 -> vector<8x256xf32>
    %c7 = arith.constant 7 : index
    %c0_28 = arith.constant 0 : index
    %c0_29 = arith.constant 0 : index
    %46 = vector.load %arg8[%c7, %c0_28, %c0_29] : memref<9x8x256xf32, #tpu.memory_space<vmem>>, vector<1x8x256xf32>
    %47 = vector.shape_cast %46 : vector<1x8x256xf32> to vector<8x256xf32>
    %cst_30 = arith.constant 0.000000e+00 : f32
    %48 = vector.broadcast %cst_30 : f32 to vector<8x256xf32>
    %49 = arith.cmpf one, %47, %48 : vector<8x256xf32>
    %cst_31 = arith.constant 0.000000e+00 : f32
    %50 = vector.broadcast %cst_31 : f32 to vector<8x256xf32>
    %51 = arith.select %49, %45, %50 : vector<8x256xi1>, vector<8x256xf32>
    %c239_i32 = arith.constant 239 : i32
    %52 = tpu.dynamic_rotate %1 by %c239_i32 dim 1 : vector<8x256xf32>, i32 -> vector<8x256xf32>
    %c8 = arith.constant 8 : index
    %c0_32 = arith.constant 0 : index
    %c0_33 = arith.constant 0 : index
    %53 = vector.load %arg8[%c8, %c0_32, %c0_33] : memref<9x8x256xf32, #tpu.memory_space<vmem>>, vector<1x8x256xf32>
    %54 = vector.shape_cast %53 : vector<1x8x256xf32> to vector<8x256xf32>
    %cst_34 = arith.constant 0.000000e+00 : f32
    %55 = vector.broadcast %cst_34 : f32 to vector<8x256xf32>
    %56 = arith.cmpf one, %54, %55 : vector<8x256xf32>
    %cst_35 = arith.constant 0.000000e+00 : f32
    %57 = vector.broadcast %cst_35 : f32 to vector<8x256xf32>
    %58 = arith.select %56, %52, %57 : vector<8x256xi1>, vector<8x256xf32>
    %59 = tpu.concatenate %9, %16, %23, %30, %1, %37, %44, %51, %58 in 0 : vector<8x256xf32>, vector<8x256xf32>, vector<8x256xf32>, vector<8x256xf32>, vector<8x256xf32>, vector<8x256xf32>, vector<8x256xf32>, vector<8x256xf32>, vector<8x256xf32> -> vector<72x256xf32>
    %60 = arith.truncf %2 : vector<8x72xf32> to vector<8x72xbf16>
    %61 = arith.extf %60 : vector<8x72xbf16> to vector<8x72xf32>
    %62 = arith.subf %2, %61 : vector<8x72xf32>
    %63 = arith.truncf %62 : vector<8x72xf32> to vector<8x72xbf16>
    %64 = arith.truncf %59 : vector<72x256xf32> to vector<72x256xbf16>
    %65 = arith.extf %64 : vector<72x256xbf16> to vector<72x256xf32>
    %66 = arith.subf %59, %65 : vector<72x256xf32>
    %67 = arith.truncf %66 : vector<72x256xf32> to vector<72x256xbf16>
    %cst_36 = arith.constant dense<0.000000e+00> : vector<8x256xf32>
    %68 = tpu.matmul %60, %64, %cst_36 {dimension_numbers = #tpu.dot_dimension_numbers<[1], [0], [0], [1], [0, 0, 1, 1], [], []>} : vector<8x72xbf16>, vector<72x256xbf16>, vector<8x256xf32> -> vector<8x256xf32>
    %cst_37 = arith.constant dense<0.000000e+00> : vector<8x256xf32>
    %69 = tpu.matmul %63, %64, %cst_37 {dimension_numbers = #tpu.dot_dimension_numbers<[1], [0], [0], [1], [0, 0, 1, 1], [], []>} : vector<8x72xbf16>, vector<72x256xbf16>, vector<8x256xf32> -> vector<8x256xf32>
    %70 = arith.addf %68, %69 : vector<8x256xf32>
    %cst_38 = arith.constant dense<0.000000e+00> : vector<8x256xf32>
    %71 = tpu.matmul %60, %67, %cst_38 {dimension_numbers = #tpu.dot_dimension_numbers<[1], [0], [0], [1], [0, 0, 1, 1], [], []>} : vector<8x72xbf16>, vector<72x256xbf16>, vector<8x256xf32> -> vector<8x256xf32>
    %72 = arith.addf %70, %71 : vector<8x256xf32>
    %c0_39 = arith.constant 0 : index
    %c0_40 = arith.constant 0 : index
    %73 = vector.load %arg3[%c0_39, %c0_40] : memref<8x1xf32, #tpu.memory_space<vmem>>, vector<8x1xf32>
    %74 = vector.broadcast %73 : vector<8x1xf32> to vector<8x256xf32>
    %75 = arith.addf %72, %74 : vector<8x256xf32>
    %cst_41 = arith.constant 0.000000e+00 : f32
    %76 = vector.broadcast %cst_41 : f32 to vector<8x256xf32>
    %77 = arith.maximumf %75, %76 : vector<8x256xf32>
    %c0_42 = arith.constant 0 : index
    %c0_43 = arith.constant 0 : index
    %78 = vector.load %arg4[%c0_42, %c0_43] : memref<8x72xf32, #tpu.memory_space<vmem>>, vector<8x72xf32>
    %c17_i32_44 = arith.constant 17 : i32
    %79 = tpu.dynamic_rotate %77 by %c17_i32_44 dim 1 : vector<8x256xf32>, i32 -> vector<8x256xf32>
    %c0_45 = arith.constant 0 : index
    %c0_46 = arith.constant 0 : index
    %c0_47 = arith.constant 0 : index
    %80 = vector.load %arg8[%c0_45, %c0_46, %c0_47] : memref<9x8x256xf32, #tpu.memory_space<vmem>>, vector<1x8x256xf32>
    %81 = vector.shape_cast %80 : vector<1x8x256xf32> to vector<8x256xf32>
    %cst_48 = arith.constant 0.000000e+00 : f32
    %82 = vector.broadcast %cst_48 : f32 to vector<8x256xf32>
    %83 = arith.cmpf one, %81, %82 : vector<8x256xf32>
    %cst_49 = arith.constant 0.000000e+00 : f32
    %84 = vector.broadcast %cst_49 : f32 to vector<8x256xf32>
    %85 = arith.select %83, %79, %84 : vector<8x256xi1>, vector<8x256xf32>
    %c16_i32_50 = arith.constant 16 : i32
    %86 = tpu.dynamic_rotate %77 by %c16_i32_50 dim 1 : vector<8x256xf32>, i32 -> vector<8x256xf32>
    %c1_51 = arith.constant 1 : index
    %c0_52 = arith.constant 0 : index
    %c0_53 = arith.constant 0 : index
    %87 = vector.load %arg8[%c1_51, %c0_52, %c0_53] : memref<9x8x256xf32, #tpu.memory_space<vmem>>, vector<1x8x256xf32>
    %88 = vector.shape_cast %87 : vector<1x8x256xf32> to vector<8x256xf32>
    %cst_54 = arith.constant 0.000000e+00 : f32
    %89 = vector.broadcast %cst_54 : f32 to vector<8x256xf32>
    %90 = arith.cmpf one, %88, %89 : vector<8x256xf32>
    %cst_55 = arith.constant 0.000000e+00 : f32
    %91 = vector.broadcast %cst_55 : f32 to vector<8x256xf32>
    %92 = arith.select %90, %86, %91 : vector<8x256xi1>, vector<8x256xf32>
    %c15_i32_56 = arith.constant 15 : i32
    %93 = tpu.dynamic_rotate %77 by %c15_i32_56 dim 1 : vector<8x256xf32>, i32 -> vector<8x256xf32>
    %c2_57 = arith.constant 2 : index
    %c0_58 = arith.constant 0 : index
    %c0_59 = arith.constant 0 : index
    %94 = vector.load %arg8[%c2_57, %c0_58, %c0_59] : memref<9x8x256xf32, #tpu.memory_space<vmem>>, vector<1x8x256xf32>
    %95 = vector.shape_cast %94 : vector<1x8x256xf32> to vector<8x256xf32>
    %cst_60 = arith.constant 0.000000e+00 : f32
    %96 = vector.broadcast %cst_60 : f32 to vector<8x256xf32>
    %97 = arith.cmpf one, %95, %96 : vector<8x256xf32>
    %cst_61 = arith.constant 0.000000e+00 : f32
    %98 = vector.broadcast %cst_61 : f32 to vector<8x256xf32>
    %99 = arith.select %97, %93, %98 : vector<8x256xi1>, vector<8x256xf32>
    %c1_i32_62 = arith.constant 1 : i32
    %100 = tpu.dynamic_rotate %77 by %c1_i32_62 dim 1 : vector<8x256xf32>, i32 -> vector<8x256xf32>
    %c3_63 = arith.constant 3 : index
    %c0_64 = arith.constant 0 : index
    %c0_65 = arith.constant 0 : index
    %101 = vector.load %arg8[%c3_63, %c0_64, %c0_65] : memref<9x8x256xf32, #tpu.memory_space<vmem>>, vector<1x8x256xf32>
    %102 = vector.shape_cast %101 : vector<1x8x256xf32> to vector<8x256xf32>
    %cst_66 = arith.constant 0.000000e+00 : f32
    %103 = vector.broadcast %cst_66 : f32 to vector<8x256xf32>
    %104 = arith.cmpf one, %102, %103 : vector<8x256xf32>
    %cst_67 = arith.constant 0.000000e+00 : f32
    %105 = vector.broadcast %cst_67 : f32 to vector<8x256xf32>
    %106 = arith.select %104, %100, %105 : vector<8x256xi1>, vector<8x256xf32>
    %c255_i32_68 = arith.constant 255 : i32
    %107 = tpu.dynamic_rotate %77 by %c255_i32_68 dim 1 : vector<8x256xf32>, i32 -> vector<8x256xf32>
    %c5_69 = arith.constant 5 : index
    %c0_70 = arith.constant 0 : index
    %c0_71 = arith.constant 0 : index
    %108 = vector.load %arg8[%c5_69, %c0_70, %c0_71] : memref<9x8x256xf32, #tpu.memory_space<vmem>>, vector<1x8x256xf32>
    %109 = vector.shape_cast %108 : vector<1x8x256xf32> to vector<8x256xf32>
    %cst_72 = arith.constant 0.000000e+00 : f32
    %110 = vector.broadcast %cst_72 : f32 to vector<8x256xf32>
    %111 = arith.cmpf one, %109, %110 : vector<8x256xf32>
    %cst_73 = arith.constant 0.000000e+00 : f32
    %112 = vector.broadcast %cst_73 : f32 to vector<8x256xf32>
    %113 = arith.select %111, %107, %112 : vector<8x256xi1>, vector<8x256xf32>
    %c241_i32_74 = arith.constant 241 : i32
    %114 = tpu.dynamic_rotate %77 by %c241_i32_74 dim 1 : vector<8x256xf32>, i32 -> vector<8x256xf32>
    %c6_75 = arith.constant 6 : index
    %c0_76 = arith.constant 0 : index
    %c0_77 = arith.constant 0 : index
    %115 = vector.load %arg8[%c6_75, %c0_76, %c0_77] : memref<9x8x256xf32, #tpu.memory_space<vmem>>, vector<1x8x256xf32>
    %116 = vector.shape_cast %115 : vector<1x8x256xf32> to vector<8x256xf32>
    %cst_78 = arith.constant 0.000000e+00 : f32
    %117 = vector.broadcast %cst_78 : f32 to vector<8x256xf32>
    %118 = arith.cmpf one, %116, %117 : vector<8x256xf32>
    %cst_79 = arith.constant 0.000000e+00 : f32
    %119 = vector.broadcast %cst_79 : f32 to vector<8x256xf32>
    %120 = arith.select %118, %114, %119 : vector<8x256xi1>, vector<8x256xf32>
    %c240_i32_80 = arith.constant 240 : i32
    %121 = tpu.dynamic_rotate %77 by %c240_i32_80 dim 1 : vector<8x256xf32>, i32 -> vector<8x256xf32>
    %c7_81 = arith.constant 7 : index
    %c0_82 = arith.constant 0 : index
    %c0_83 = arith.constant 0 : index
    %122 = vector.load %arg8[%c7_81, %c0_82, %c0_83] : memref<9x8x256xf32, #tpu.memory_space<vmem>>, vector<1x8x256xf32>
    %123 = vector.shape_cast %122 : vector<1x8x256xf32> to vector<8x256xf32>
    %cst_84 = arith.constant 0.000000e+00 : f32
    %124 = vector.broadcast %cst_84 : f32 to vector<8x256xf32>
    %125 = arith.cmpf one, %123, %124 : vector<8x256xf32>
    %cst_85 = arith.constant 0.000000e+00 : f32
    %126 = vector.broadcast %cst_85 : f32 to vector<8x256xf32>
    %127 = arith.select %125, %121, %126 : vector<8x256xi1>, vector<8x256xf32>
    %c239_i32_86 = arith.constant 239 : i32
    %128 = tpu.dynamic_rotate %77 by %c239_i32_86 dim 1 : vector<8x256xf32>, i32 -> vector<8x256xf32>
    %c8_87 = arith.constant 8 : index
    %c0_88 = arith.constant 0 : index
    %c0_89 = arith.constant 0 : index
    %129 = vector.load %arg8[%c8_87, %c0_88, %c0_89] : memref<9x8x256xf32, #tpu.memory_space<vmem>>, vector<1x8x256xf32>
    %130 = vector.shape_cast %129 : vector<1x8x256xf32> to vector<8x256xf32>
    %cst_90 = arith.constant 0.000000e+00 : f32
    %131 = vector.broadcast %cst_90 : f32 to vector<8x256xf32>
    %132 = arith.cmpf one, %130, %131 : vector<8x256xf32>
    %cst_91 = arith.constant 0.000000e+00 : f32
    %133 = vector.broadcast %cst_91 : f32 to vector<8x256xf32>
    %134 = arith.select %132, %128, %133 : vector<8x256xi1>, vector<8x256xf32>
    %135 = tpu.concatenate %85, %92, %99, %106, %77, %113, %120, %127, %134 in 0 : vector<8x256xf32>, vector<8x256xf32>, vector<8x256xf32>, vector<8x256xf32>, vector<8x256xf32>, vector<8x256xf32>, vector<8x256xf32>, vector<8x256xf32>, vector<8x256xf32> -> vector<72x256xf32>
    %136 = arith.truncf %78 : vector<8x72xf32> to vector<8x72xbf16>
    %137 = arith.extf %136 : vector<8x72xbf16> to vector<8x72xf32>
    %138 = arith.subf %78, %137 : vector<8x72xf32>
    %139 = arith.truncf %138 : vector<8x72xf32> to vector<8x72xbf16>
    %140 = arith.truncf %135 : vector<72x256xf32> to vector<72x256xbf16>
    %141 = arith.extf %140 : vector<72x256xbf16> to vector<72x256xf32>
    %142 = arith.subf %135, %141 : vector<72x256xf32>
    %143 = arith.truncf %142 : vector<72x256xf32> to vector<72x256xbf16>
    %cst_92 = arith.constant dense<0.000000e+00> : vector<8x256xf32>
    %144 = tpu.matmul %136, %140, %cst_92 {dimension_numbers = #tpu.dot_dimension_numbers<[1], [0], [0], [1], [0, 0, 1, 1], [], []>} : vector<8x72xbf16>, vector<72x256xbf16>, vector<8x256xf32> -> vector<8x256xf32>
    %cst_93 = arith.constant dense<0.000000e+00> : vector<8x256xf32>
    %145 = tpu.matmul %139, %140, %cst_93 {dimension_numbers = #tpu.dot_dimension_numbers<[1], [0], [0], [1], [0, 0, 1, 1], [], []>} : vector<8x72xbf16>, vector<72x256xbf16>, vector<8x256xf32> -> vector<8x256xf32>
    %146 = arith.addf %144, %145 : vector<8x256xf32>
    %cst_94 = arith.constant dense<0.000000e+00> : vector<8x256xf32>
    %147 = tpu.matmul %136, %143, %cst_94 {dimension_numbers = #tpu.dot_dimension_numbers<[1], [0], [0], [1], [0, 0, 1, 1], [], []>} : vector<8x72xbf16>, vector<72x256xbf16>, vector<8x256xf32> -> vector<8x256xf32>
    %148 = arith.addf %146, %147 : vector<8x256xf32>
    %c0_95 = arith.constant 0 : index
    %c0_96 = arith.constant 0 : index
    %149 = vector.load %arg5[%c0_95, %c0_96] : memref<8x1xf32, #tpu.memory_space<vmem>>, vector<8x1xf32>
    %150 = vector.broadcast %149 : vector<8x1xf32> to vector<8x256xf32>
    %151 = arith.addf %148, %150 : vector<8x256xf32>
    %cst_97 = arith.constant 0.000000e+00 : f32
    %152 = vector.broadcast %cst_97 : f32 to vector<8x256xf32>
    %153 = arith.maximumf %151, %152 : vector<8x256xf32>
    %c0_98 = arith.constant 0 : index
    %c0_99 = arith.constant 0 : index
    %154 = vector.load %arg6[%c0_98, %c0_99] : memref<8x8xf32, #tpu.memory_space<vmem>>, vector<8x8xf32>
    %155 = arith.truncf %154 : vector<8x8xf32> to vector<8x8xbf16>
    %156 = arith.extf %155 : vector<8x8xbf16> to vector<8x8xf32>
    %157 = arith.subf %154, %156 : vector<8x8xf32>
    %158 = arith.truncf %157 : vector<8x8xf32> to vector<8x8xbf16>
    %159 = arith.truncf %153 : vector<8x256xf32> to vector<8x256xbf16>
    %160 = arith.extf %159 : vector<8x256xbf16> to vector<8x256xf32>
    %161 = arith.subf %153, %160 : vector<8x256xf32>
    %162 = arith.truncf %161 : vector<8x256xf32> to vector<8x256xbf16>
    %cst_100 = arith.constant dense<0.000000e+00> : vector<8x256xf32>
    %163 = tpu.matmul %155, %159, %cst_100 {dimension_numbers = #tpu.dot_dimension_numbers<[1], [0], [0], [1], [0, 0, 1, 1], [], []>} : vector<8x8xbf16>, vector<8x256xbf16>, vector<8x256xf32> -> vector<8x256xf32>
    %cst_101 = arith.constant dense<0.000000e+00> : vector<8x256xf32>
    %164 = tpu.matmul %158, %159, %cst_101 {dimension_numbers = #tpu.dot_dimension_numbers<[1], [0], [0], [1], [0, 0, 1, 1], [], []>} : vector<8x8xbf16>, vector<8x256xbf16>, vector<8x256xf32> -> vector<8x256xf32>
    %165 = arith.addf %163, %164 : vector<8x256xf32>
    %cst_102 = arith.constant dense<0.000000e+00> : vector<8x256xf32>
    %166 = tpu.matmul %155, %162, %cst_102 {dimension_numbers = #tpu.dot_dimension_numbers<[1], [0], [0], [1], [0, 0, 1, 1], [], []>} : vector<8x8xbf16>, vector<8x256xbf16>, vector<8x256xf32> -> vector<8x256xf32>
    %167 = arith.addf %165, %166 : vector<8x256xf32>
    %c0_103 = arith.constant 0 : index
    %c0_104 = arith.constant 0 : index
    %168 = vector.load %arg7[%c0_103, %c0_104] : memref<8x1xf32, #tpu.memory_space<vmem>>, vector<8x1xf32>
    %169 = vector.broadcast %168 : vector<8x1xf32> to vector<8x256xf32>
    %170 = arith.addf %167, %169 : vector<8x256xf32>
    %171 = arith.addf %170, %1 : vector<8x256xf32>
    %c0_105 = arith.constant 0 : index
    %c0_106 = arith.constant 0 : index
    %c0_107 = arith.constant 0 : index
    %172 = vector.load %arg9[%c0_105, %c0_106, %c0_107] : memref<1x8x256xf32, #tpu.memory_space<vmem>>, vector<1x8x256xf32>
    %173 = vector.shape_cast %172 : vector<1x8x256xf32> to vector<8x256xf32>
    %174 = vector.shape_cast %171 : vector<8x256xf32> to vector<1x8x256xf32>
    tpu.vector_store %arg9[%c0_105, %c0_106, %c0_107], %174 {strides = array<i32>} : memref<1x8x256xf32, #tpu.memory_space<vmem>>, vector<1x8x256xf32>,
    return
  }
  func.func @transform_0(%arg0: i32) -> (i32, i32, i32) {
    %c0_i32 = arith.constant 0 : i32
    %c0_i32_0 = arith.constant 0 : i32
    %c0_i32_1 = arith.constant 0 : i32
    return %arg0, %c0_i32, %c0_i32_0 : i32, i32, i32
  }
  func.func @transform_1(%arg0: i32) -> (i32, i32) {
    %c0_i32 = arith.constant 0 : i32
    %c0_i32_0 = arith.constant 0 : i32
    %c0_i32_1 = arith.constant 0 : i32
    return %c0_i32, %c0_i32_0 : i32, i32
  }
  func.func @transform_2(%arg0: i32) -> (i32, i32) {
    %c0_i32 = arith.constant 0 : i32
    %c0_i32_0 = arith.constant 0 : i32
    %c0_i32_1 = arith.constant 0 : i32
    return %c0_i32, %c0_i32_0 : i32, i32
  }
  func.func @transform_3(%arg0: i32) -> (i32, i32) {
    %c0_i32 = arith.constant 0 : i32
    %c0_i32_0 = arith.constant 0 : i32
    %c0_i32_1 = arith.constant 0 : i32
    return %c0_i32, %c0_i32_0 : i32, i32
  }
  func.func @transform_4(%arg0: i32) -> (i32, i32) {
    %c0_i32 = arith.constant 0 : i32
    %c0_i32_0 = arith.constant 0 : i32
    %c0_i32_1 = arith.constant 0 : i32
    return %c0_i32, %c0_i32_0 : i32, i32
  }
  func.func @transform_5(%arg0: i32) -> (i32, i32) {
    %c0_i32 = arith.constant 0 : i32
    %c0_i32_0 = arith.constant 0 : i32
    %c0_i32_1 = arith.constant 0 : i32
    return %c0_i32, %c0_i32_0 : i32, i32
  }
  func.func @transform_6(%arg0: i32) -> (i32, i32) {
    %c0_i32 = arith.constant 0 : i32
    %c0_i32_0 = arith.constant 0 : i32
    %c0_i32_1 = arith.constant 0 : i32
    return %c0_i32, %c0_i32_0 : i32, i32
  }
  func.func @transform_7(%arg0: i32) -> (i32, i32, i32) {
    %c0_i32 = arith.constant 0 : i32
    %c0_i32_0 = arith.constant 0 : i32
    %c0_i32_1 = arith.constant 0 : i32
    %c0_i32_2 = arith.constant 0 : i32
    return %c0_i32, %c0_i32_0, %c0_i32_1 : i32, i32, i32
  }
  func.func @transform_8(%arg0: i32) -> (i32, i32, i32) {
    %c0_i32 = arith.constant 0 : i32
    %c0_i32_0 = arith.constant 0 : i32
    %c0_i32_1 = arith.constant 0 : i32
    return %arg0, %c0_i32, %c0_i32_0 : i32, i32, i32
  }
}

</mosaic_0001>

<llo_original>
// kernel: tpu_custom_call.1
$region0: #{tpu_custom_call.1}
  #allocation0 [shape = 'u32[]', space=smem, size = 0x4, offset = 0x4, fixed_abs, tag = 'smem constant byte address 0x4 - core index']
  #allocation1 [shape = 'u32[144,128]{1,0:T(1,128)}', space=vmem, size = 0x12000, scoped, tag = 'internal scratch']
  %s0 = inlined_call_operand.vmem [shape: f32[1,8,256], index: 0, kind: input, shape index: {}]
  %s1 = inlined_call_operand.vmem [shape: f32[8,72], index: 1, kind: input, shape index: {}]
  %s2 = inlined_call_operand.vmem [shape: f32[8,1], index: 2, kind: input, shape index: {}]
  %s3 = inlined_call_operand.vmem [shape: f32[8,72], index: 3, kind: input, shape index: {}]
  %s4 = inlined_call_operand.vmem [shape: f32[8,1], index: 4, kind: input, shape index: {}]
  %s5 = inlined_call_operand.hbm [shape: f32[8,8], index: 5, kind: input, shape index: {}]
  %s6 = inlined_call_operand.vmem [shape: f32[8,1], index: 6, kind: input, shape index: {}]
  %s7 = inlined_call_operand.hbm [shape: f32[9,8,256], index: 7, kind: input, shape index: {}]
  %s8 = inlined_call_operand.hbm [shape: f32[1,8,256], index: 8, kind: output, shape index: {}]
  %s9 = sld [smem:[#allocation0]]
  $region50: #{tpu_custom_call.1} parent=0
    _
  %s11 = ssub.s32 1, %s9
  %s12 = scalar_select 0, %s11, %s9
  $region1: #{tpu_custom_call.1} parent=0
    #allocation2 [shape = 'u8[4096]{0}', space=vmem, size = 0x1000, scoped, tag = 'input window, operand 5, single buffered']
    #allocation3 [shape = 's32[1]{0}', space=sflag, size = 0x4, scoped, tag = 'scoped memory for tpu_custom_call.1']
    #allocation4 [shape = 's32[1]{0}', space=sflag, size = 0x4, scoped, tag = 'scoped memory for tpu_custom_call.1']
    #allocation5 [shape = 'u8[73728]{0}', space=vmem, size = 0x12000, scoped, tag = 'input window, operand 7, single buffered']
    #allocation6 [shape = 's32[1]{0}', space=sflag, size = 0x4, scoped, tag = 'scoped memory for tpu_custom_call.1']
    #allocation7 [shape = 'u8[8192]{0}', space=vmem, size = 0x2000, scoped, tag = 'output window, operand 0, single buffered']
    %13 = vsyncpa [#allocation3], 0
    %14 = vsyncpa [#allocation6], 0
    %15 = vsyncpa [#allocation4], 0
    // Predicated region
    $region2: #{tpu_custom_call.1} parent=1 // pred_check
      _
    $region3: #{tpu_custom_call.1} parent=1 // pred_check_branch
      %17 = sbr.rel (0) target = $region5
    $region4: #{tpu_custom_call.1} parent=1 // pred_region
      _
    $region5: #{tpu_custom_call.1} parent=1 // pred_fallthru
      _
    // Predicated region
    $region6: #{tpu_custom_call.1} parent=1 // pred_check
      _
    $region7: #{tpu_custom_call.1} parent=1 // pred_check_branch
      %19 = sbr.rel (0) target = $region9
    $region8: #{tpu_custom_call.1} parent=1 // pred_region
      _
    $region9: #{tpu_custom_call.1} parent=1 // pred_fallthru
      _
    // Predicated region
    $region10: #{tpu_custom_call.1} parent=1 // pred_check
      _
    $region11: #{tpu_custom_call.1} parent=1 // pred_check_branch
      %21 = sbr.rel (0) target = $region13
    $region12: #{tpu_custom_call.1} parent=1 // pred_region
      _
    $region13: #{tpu_custom_call.1} parent=1 // pred_fallthru
      _
    // Predicated region
    $region14: #{tpu_custom_call.1} parent=1 // pred_check
      _
    $region15: #{tpu_custom_call.1} parent=1 // pred_check_branch
      %23 = sbr.rel (0) target = $region17
    $region16: #{tpu_custom_call.1} parent=1 // pred_region
      _
    $region17: #{tpu_custom_call.1} parent=1 // pred_fallthru
      _
    // Predicated region
    $region18: #{tpu_custom_call.1} parent=1 // pred_check
      _
    $region19: #{tpu_custom_call.1} parent=1 // pred_check_branch
      %25 = sbr.rel (0) target = $region21
    $region20: #{tpu_custom_call.1} parent=1 // pred_region
      _
    $region21: #{tpu_custom_call.1} parent=1 // pred_fallthru
      _
    // Predicated region
    $region22: #{tpu_custom_call.1} parent=1 // pred_check
      _
    $region23: #{tpu_custom_call.1} parent=1 // pred_check_branch
      %27 = sbr.rel (0) target = $region25
    $region24: #{tpu_custom_call.1} parent=1 // pred_region
      %s29 = ssub.s32 128, 128
      %30 = vsyncadd [#allocation3], %s29
      %s32 = sshll.u32 [#allocation2], 4
      %s33 = int_to_ptr.vmem [resolvable:$true] %s32
      %35 = dma.hbm_to_vmem [thread:$0]  %s5, 128, %s33, [#allocation3]
    $region25: #{tpu_custom_call.1} parent=1 // pred_fallthru
      _
    // Predicated region
    $region26: #{tpu_custom_call.1} parent=1 // pred_check
      _
    $region27: #{tpu_custom_call.1} parent=1 // pred_check_branch
      %37 = sbr.rel (0) target = $region29
    $region28: #{tpu_custom_call.1} parent=1 // pred_region
      _
    $region29: #{tpu_custom_call.1} parent=1 // pred_fallthru
      _
    // Predicated region
    $region30: #{tpu_custom_call.1} parent=1 // pred_check
      _
    $region31: #{tpu_custom_call.1} parent=1 // pred_check_branch
      %39 = sbr.rel (0) target = $region33
    $region32: #{tpu_custom_call.1} parent=1 // pred_region
      %s41 = ssub.s32 2304, 2304
      %42 = vsyncadd [#allocation6], %s41
      %s43 = sshll.u32 [#allocation5], 4
      %s44 = int_to_ptr.vmem [resolvable:$true] %s43
      %49 = dma.hbm_to_vmem [thread:$0]  %s7, 2304, %s44, [#allocation6], 256, 256, 16
    $region33: #{tpu_custom_call.1} parent=1 // pred_fallthru
      _
    // Predicated region
    $region34: #{tpu_custom_call.1} parent=1 // pred_check
      _
    $region35: #{tpu_custom_call.1} parent=1 // pred_check_branch
      %51 = sbr.rel (0) target = $region37
    $region36: #{tpu_custom_call.1} parent=1 // pred_region
      %52 = dma.done [#allocation3], 128
    $region37: #{tpu_custom_call.1} parent=1 // pred_fallthru
      _
    // Predicated region
    $region38: #{tpu_custom_call.1} parent=1 // pred_check
      _
    $region39: #{tpu_custom_call.1} parent=1 // pred_check_branch
      %54 = sbr.rel (0) target = $region41
    $region40: #{tpu_custom_call.1} parent=1 // pred_region
      %55 = dma.done [#allocation6], 2304
    $region41: #{tpu_custom_call.1} parent=1 // pred_fallthru
      _
    %v57 = vld [vmem:[%s0] sm:$0xff]
    %v58 = vld [vmem:[%s0 + $0x8] sm:$0xff]
    %v59 = vld [vmem:[%s1] sm:$0xff]
    %60 = vrot.lane.b32.xlu0 %v57, 17
    %v61 = vpop.permute.xlu0 %60
    %62 = vrot.lane.b32.xlu0 %v58, 17
    %v63 = vpop.permute.xlu0 %62
    %v64 = vlaneseq
    %v65 = vand.u32 %v64, 127
    %vm66 = vcmp.lt.s32.totalorder %v65, 17
    %v67 = vsel %vm66, %v61, %v63
    %v68 = vsel %vm66, %v63, %v61
    %v69 = vld [vmem:[#allocation5] sm:$0xff]
    %v70 = vld [vmem:[#allocation5 + $0x8] sm:$0xff]
    %vm71 = vcmp.ne.f32.partialorder %v69, 0.0
    %vm72 = vcmp.ne.f32.partialorder %v70, 0.0
    %v73 = vsel %vm71, %v68, 0.0
    %v74 = vsel %vm72, %v67, 0.0
    %75 = vrot.lane.b32.xlu0 %v57, 16
    %v76 = vpop.permute.xlu0 %75
    %77 = vrot.lane.b32.xlu0 %v58, 16
    %v78 = vpop.permute.xlu0 %77
    %vm79 = vcmp.lt.s32.totalorder %v65, 16
    %v80 = vsel %vm79, %v76, %v78
    %v81 = vsel %vm79, %v78, %v76
    %s82 = scalar_lea.vmem [#allocation5], 16
    %v83 = vld [vmem:[%s82] sm:$0xff]
    %v84 = vld [vmem:[%s82 + $0x8] sm:$0xff]
    %vm85 = vcmp.ne.f32.partialorder %v83, 0.0
    %vm86 = vcmp.ne.f32.partialorder %v84, 0.0
    %v87 = vsel %vm85, %v81, 0.0
    %v88 = vsel %vm86, %v80, 0.0
    %89 = vrot.lane.b32.xlu0 %v57, 15
    %v90 = vpop.permute.xlu0 %89
    %91 = vrot.lane.b32.xlu0 %v58, 15
    %v92 = vpop.permute.xlu0 %91
    %vm93 = vcmp.lt.s32.totalorder %v65, 15
    %v94 = vsel %vm93, %v90, %v92
    %v95 = vsel %vm93, %v92, %v90
    %s96 = scalar_lea.vmem [#allocation5], 32
    %v97 = vld [vmem:[%s96] sm:$0xff]
    %v98 = vld [vmem:[%s96 + $0x8] sm:$0xff]
    %vm99 = vcmp.ne.f32.partialorder %v97, 0.0
    %vm100 = vcmp.ne.f32.partialorder %v98, 0.0
    %v101 = vsel %vm99, %v95, 0.0
    %v102 = vsel %vm100, %v94, 0.0
    %103 = vrot.lane.b32.xlu0 %v57, 1
    %v104 = vpop.permute.xlu0 %103
    %105 = vrot.lane.b32.xlu0 %v58, 1
    %v106 = vpop.permute.xlu0 %105
    %vm107 = vcmp.lt.s32.totalorder %v65, 1
    %v108 = vsel %vm107, %v104, %v106
    %v109 = vsel %vm107, %v106, %v104
    %s110 = scalar_lea.vmem [#allocation5], 48
    %v111 = vld [vmem:[%s110] sm:$0xff]
    %v112 = vld [vmem:[%s110 + $0x8] sm:$0xff]
    %vm113 = vcmp.ne.f32.partialorder %v111, 0.0
    %vm114 = vcmp.ne.f32.partialorder %v112, 0.0
    %v115 = vsel %vm113, %v109, 0.0
    %v116 = vsel %vm114, %v108, 0.0
    %117 = vrot.lane.b32.xlu0 %v57, 127
    %v118 = vpop.permute.xlu0 %117
    %119 = vrot.lane.b32.xlu0 %v58, 127
    %v120 = vpop.permute.xlu0 %119
    %vm121 = vcmp.lt.s32.totalorder %v65, 127
    %v122 = vsel %vm121, %v118, %v120
    %v123 = vsel %vm121, %v120, %v118
    %s124 = scalar_lea.vmem [#allocation5], 80
    %v125 = vld [vmem:[%s124] sm:$0xff]
    %v126 = vld [vmem:[%s124 + $0x8] sm:$0xff]
    %vm127 = vcmp.ne.f32.partialorder %v125, 0.0
    %vm128 = vcmp.ne.f32.partialorder %v126, 0.0
    %v129 = vsel %vm127, %v122, 0.0
    %v130 = vsel %vm128, %v123, 0.0
    %131 = vrot.lane.b32.xlu0 %v57, 113
    %v132 = vpop.permute.xlu0 %131
    %133 = vrot.lane.b32.xlu0 %v58, 113
    %v134 = vpop.permute.xlu0 %133
    %vm135 = vcmp.lt.s32.totalorder %v65, 113
    %v136 = vsel %vm135, %v132, %v134
    %v137 = vsel %vm135, %v134, %v132
    %s138 = scalar_lea.vmem [#allocation5], 96
    %v139 = vld [vmem:[%s138] sm:$0xff]
    %v140 = vld [vmem:[%s138 + $0x8] sm:$0xff]
    %vm141 = vcmp.ne.f32.partialorder %v139, 0.0
    %vm142 = vcmp.ne.f32.partialorder %v140, 0.0
    %v143 = vsel %vm141, %v136, 0.0
    %v144 = vsel %vm142, %v137, 0.0
    %145 = vrot.lane.b32.xlu0 %v57, 112
    %v146 = vpop.permute.xlu0 %145
    %147 = vrot.lane.b32.xlu0 %v58, 112
    %v148 = vpop.permute.xlu0 %147
    %vm149 = vcmp.lt.s32.totalorder %v65, 112
    %v150 = vsel %vm149, %v146, %v148
    %v151 = vsel %vm149, %v148, %v146
    %s152 = scalar_lea.vmem [#allocation5], 112
    %v153 = vld [vmem:[%s152] sm:$0xff]
    %v154 = vld [vmem:[%s152 + $0x8] sm:$0xff]
    %vm155 = vcmp.ne.f32.partialorder %v153, 0.0
    %vm156 = vcmp.ne.f32.partialorder %v154, 0.0
    %v157 = vsel %vm155, %v150, 0.0
    %v158 = vsel %vm156, %v151, 0.0
    %159 = vrot.lane.b32.xlu0 %v57, 111
    %v160 = vpop.permute.xlu0 %159
    %161 = vrot.lane.b32.xlu0 %v58, 111
    %v162 = vpop.permute.xlu0 %161
    %vm163 = vcmp.lt.s32.totalorder %v65, 111
    %v164 = vsel %vm163, %v160, %v162
    %v165 = vsel %vm163, %v162, %v160
    %s166 = scalar_lea.vmem [#allocation5], 128
    %v167 = vld [vmem:[%s166] sm:$0xff]
    %v168 = vld [vmem:[%s166 + $0x8] sm:$0xff]
    %vm169 = vcmp.ne.f32.partialorder %v167, 0.0
    %vm170 = vcmp.ne.f32.partialorder %v168, 0.0
    %v171 = vsel %vm169, %v164, 0.0
    %v172 = vsel %vm170, %v165, 0.0
    %v173 = vpack.c.bf16 %v59, %v59
    %v174 = vunpack.c.l.bf16 %v173
    %v175 = vsub.f32 %v59, %v174
    %v176 = vpack.c.bf16 %v175, %v175
    %v177 = vpack.c.bf16 %v87, %v73
    %v178 = vpack.c.bf16 %v88, %v74
    %v179 = vpack.c.bf16 %v115, %v101
    %v180 = vpack.c.bf16 %v116, %v102
    %v181 = vpack.c.bf16 %v129, %v57
    %v182 = vpack.c.bf16 %v130, %v58
    %v183 = vpack.c.bf16 %v157, %v143
    %v184 = vpack.c.bf16 %v158, %v144
    %v185 = vpack.c.bf16 %v171, %v171
    %v186 = vpack.c.bf16 %v172, %v172
    %v187 = vunpack.c.l.bf16 %v177
    %v188 = vunpack.c.l.bf16 %v178
    %v189 = vunpack.c.h.bf16 %v177
    %v190 = vunpack.c.h.bf16 %v178
    %v191 = vunpack.c.l.bf16 %v179
    %v192 = vunpack.c.l.bf16 %v180
    %v193 = vunpack.c.h.bf16 %v179
    %v194 = vunpack.c.h.bf16 %v180
    %v195 = vunpack.c.l.bf16 %v181
    %v196 = vunpack.c.l.bf16 %v182
    %v197 = vunpack.c.h.bf16 %v181
    %v198 = vunpack.c.h.bf16 %v182
    %v199 = vunpack.c.l.bf16 %v183
    %v200 = vunpack.c.l.bf16 %v184
    %v201 = vunpack.c.h.bf16 %v183
    %v202 = vunpack.c.h.bf16 %v184
    %v203 = vunpack.c.l.bf16 %v185
    %v204 = vunpack.c.l.bf16 %v186
    %v205 = vsub.f32 %v73, %v187
    %v206 = vsub.f32 %v74, %v188
    %v207 = vsub.f32 %v87, %v189
    %v208 = vsub.f32 %v88, %v190
    %v209 = vsub.f32 %v101, %v191
    %v210 = vsub.f32 %v102, %v192
    %v211 = vsub.f32 %v115, %v193
    %v212 = vsub.f32 %v116, %v194
    %v213 = vsub.f32 %v57, %v195
    %v214 = vsub.f32 %v58, %v196
    %v215 = vsub.f32 %v129, %v197
    %v216 = vsub.f32 %v130, %v198
    %v217 = vsub.f32 %v143, %v199
    %v218 = vsub.f32 %v144, %v200
    %v219 = vsub.f32 %v157, %v201
    %v220 = vsub.f32 %v158, %v202
    %v221 = vsub.f32 %v171, %v203
    %v222 = vsub.f32 %v172, %v204
    %v223 = vpack.c.bf16 %v207, %v205
    %v224 = vpack.c.bf16 %v208, %v206
    %v225 = vpack.c.bf16 %v211, %v209
    %v226 = vpack.c.bf16 %v212, %v210
    %v227 = vpack.c.bf16 %v215, %v213
    %v228 = vpack.c.bf16 %v216, %v214
    %v229 = vpack.c.bf16 %v219, %v217
    %v230 = vpack.c.bf16 %v220, %v218
    %v231 = vpack.c.bf16 %v221, %v221
    %v232 = vpack.c.bf16 %v222, %v222
    %vm233 = vcmask 588800
    %v235 = vsel %vm233, %v176, 0
    %vm237 = vcmask 1043456
    %v239 = vsel %vm237, %v185, 0
    %v242 = vsel %vm237, %v186, 0
    %244 = vmatprep.subr.bf16.mxu0 0
    %245 = vmatpush1.bf16.msra.mxu0 0
    %246 = vmatprep.subr.bf16.mxu0 0
    %247 = vmatpush1.bf16.msra.mxu0 0
    %248 = vmatprep.subr.bf16.mxu0 0
    %249 = vmatpush1.bf16.msra.mxu0 0
    %250 = vmatprep.subr.bf16.mxu0 %v242
    %251 = vmatpush1.bf16.msra.mxu0 %v239
    %252 = vmatprep.subr.bf16.mxu0 %v184
    %253 = vmatpush1.bf16.msra.mxu0 %v183
    %254 = vmatprep.subr.bf16.mxu0 %v182
    %255 = vmatpush1.bf16.msra.mxu0 %v181
    %256 = vmatprep.subr.bf16.mxu0 %v180
    %257 = vmatpush1.bf16.msra.mxu0 %v179
    %258 = vmatprep.subr.bf16.mxu0 %v178
    %259 = vmatpush1.bf16.msra.mxu0 %v177
    %260 = vmatprep.subr.bf16.mxu0 0
    %261 = vmatpush2.bf16.msra.mxu0 0
    %262 = vmatprep.subr.bf16.mxu0 0
    %263 = vmatpush2.bf16.msra.mxu0 0
    %264 = vmatprep.subr.bf16.mxu0 0
    %265 = vmatpush2.bf16.msra.mxu0 0
    %266 = vmatprep.subr.bf16.mxu0 0
    %267 = vmatpush2.bf16.msra.mxu0 0
    %268 = vmatprep.subr.bf16.mxu0 0
    %269 = vmatpush2.bf16.msra.mxu0 0
    %270 = vmatprep.subr.bf16.mxu0 0
    %271 = vmatpush2.bf16.msra.mxu0 0
    %272 = vmatprep.subr.bf16.mxu0 0
    %273 = vmatpush2.bf16.msra.mxu0 0
    %274 = vmatprep.subr.bf16.mxu0 0
    %275 = vmatpush2.bf16.msra.mxu0 0
    %276 = vmatprep.mubr.bf16.mxu0 0
    %277 = vmatmul.mubr.bf16.gmra.mxu0 %v235
    %v278 = vpop.f32.mrf.mxu0
    %v279 = vadd.f32 0.0, %v278
    %v280 = vpop.f32.mrf.mxu0
    %v281 = vadd.f32 0.0, %v280
    %v282 = vpop.f32.mrf.mxu0
    %v283 = vpop.f32.mrf.mxu0
    %284 = vdwg.mxu0
    %v286 = vsel %vm233, %v173, 0
    %288 = vmatprep.subr.bf16.mxu0 0
    %289 = vmatpush1.bf16.msra.mxu0 0
    %290 = vmatprep.subr.bf16.mxu0 0
    %291 = vmatpush1.bf16.msra.mxu0 0
    %292 = vmatprep.subr.bf16.mxu0 0
    %293 = vmatpush1.bf16.msra.mxu0 0
    %294 = vmatprep.subr.bf16.mxu0 %v242
    %295 = vmatpush1.bf16.msra.mxu0 %v239
    %296 = vmatprep.subr.bf16.mxu0 %v184
    %297 = vmatpush1.bf16.msra.mxu0 %v183
    %298 = vmatprep.subr.bf16.mxu0 %v182
    %299 = vmatpush1.bf16.msra.mxu0 %v181
    %300 = vmatprep.subr.bf16.mxu0 %v180
    %301 = vmatpush1.bf16.msra.mxu0 %v179
    %302 = vmatprep.subr.bf16.mxu0 %v178
    %303 = vmatpush1.bf16.msra.mxu0 %v177
    %304 = vmatprep.subr.bf16.mxu0 0
    %305 = vmatpush2.bf16.msra.mxu0 0
    %306 = vmatprep.subr.bf16.mxu0 0
    %307 = vmatpush2.bf16.msra.mxu0 0
    %308 = vmatprep.subr.bf16.mxu0 0
    %309 = vmatpush2.bf16.msra.mxu0 0
    %310 = vmatprep.subr.bf16.mxu0 0
    %311 = vmatpush2.bf16.msra.mxu0 0
    %312 = vmatprep.subr.bf16.mxu0 0
    %313 = vmatpush2.bf16.msra.mxu0 0
    %314 = vmatprep.subr.bf16.mxu0 0
    %315 = vmatpush2.bf16.msra.mxu0 0
    %316 = vmatprep.subr.bf16.mxu0 0
    %317 = vmatpush2.bf16.msra.mxu0 0
    %318 = vmatprep.subr.bf16.mxu0 0
    %319 = vmatpush2.bf16.msra.mxu0 0
    %320 = vmatprep.mubr.bf16.mxu0 0
    %321 = vmatmul.mubr.bf16.gmra.mxu0 %v286
    %v322 = vpop.f32.mrf.mxu0
    %v323 = vadd.f32 %v279, %v322
    %v324 = vpop.f32.mrf.mxu0
    %v325 = vadd.f32 %v281, %v324
    %v326 = vpop.f32.mrf.mxu0
    %v327 = vpop.f32.mrf.mxu0
    %328 = vdwg.mxu0
    %v330 = vsel %vm237, %v231, 0
    %v333 = vsel %vm237, %v232, 0
    %335 = vmatprep.subr.bf16.mxu0 0
    %336 = vmatpush1.bf16.msra.mxu0 0
    %337 = vmatprep.subr.bf16.mxu0 0
    %338 = vmatpush1.bf16.msra.mxu0 0
    %339 = vmatprep.subr.bf16.mxu0 0
    %340 = vmatpush1.bf16.msra.mxu0 0
    %341 = vmatprep.subr.bf16.mxu0 %v333
    %342 = vmatpush1.bf16.msra.mxu0 %v330
    %343 = vmatprep.subr.bf16.mxu0 %v230
    %344 = vmatpush1.bf16.msra.mxu0 %v229
    %345 = vmatprep.subr.bf16.mxu0 %v228
    %346 = vmatpush1.bf16.msra.mxu0 %v227
    %347 = vmatprep.subr.bf16.mxu0 %v226
    %348 = vmatpush1.bf16.msra.mxu0 %v225
    %349 = vmatprep.subr.bf16.mxu0 %v224
    %350 = vmatpush1.bf16.msra.mxu0 %v223
    %351 = vmatprep.subr.bf16.mxu0 0
    %352 = vmatpush2.bf16.msra.mxu0 0
    %353 = vmatprep.subr.bf16.mxu0 0
    %354 = vmatpush2.bf16.msra.mxu0 0
    %355 = vmatprep.subr.bf16.mxu0 0
    %356 = vmatpush2.bf16.msra.mxu0 0
    %357 = vmatprep.subr.bf16.mxu0 0
    %358 = vmatpush2.bf16.msra.mxu0 0
    %359 = vmatprep.subr.bf16.mxu0 0
    %360 = vmatpush2.bf16.msra.mxu0 0
    %361 = vmatprep.subr.bf16.mxu0 0
    %362 = vmatpush2.bf16.msra.mxu0 0
    %363 = vmatprep.subr.bf16.mxu0 0
    %364 = vmatpush2.bf16.msra.mxu0 0
    %365 = vmatprep.subr.bf16.mxu0 0
    %366 = vmatpush2.bf16.msra.mxu0 0
    %367 = vmatprep.mubr.bf16.mxu0 0
    %368 = vmatmul.mubr.bf16.gmra.mxu0 %v286
    %v369 = vpop.f32.mrf.mxu0
    %v370 = vadd.f32 0.0, %v369
    %v371 = vpop.f32.mrf.mxu0
    %v372 = vadd.f32 0.0, %v371
    %v373 = vpop.f32.mrf.mxu0
    %v374 = vpop.f32.mrf.mxu0
    %375 = vdwg.mxu0
    %v376 = vadd.f32 %v323, %v370
    %v377 = vadd.f32 %v325, %v372
    %v378 = vld [vmem:[%s2] sm:$0xff]
    %380 = vset.pattern.permute.xlu0 0
    %381 = vperm.xlu0 %380, %v378
    %v382 = vpop.permute.xlu0 %381
    %v384 = vadd.f32 %v376, %v382
    %v385 = vadd.f32 %v377, %v382
    %v386 = vmax.f32 %v384, 0.0
    %v387 = vmax.f32 %v385, 0.0
    %v388 = vld [vmem:[%s3] sm:$0xff]
    %389 = vrot.lane.b32.xlu0 %v386, 17
    %v390 = vpop.permute.xlu0 %389
    %391 = vrot.lane.b32.xlu0 %v387, 17
    %v392 = vpop.permute.xlu0 %391
    %v393 = vsel %vm66, %v390, %v392
    %v394 = vsel %vm66, %v392, %v390
    %v395 = vsel %vm71, %v394, 0.0
    %v396 = vsel %vm72, %v393, 0.0
    %397 = vrot.lane.b32.xlu0 %v386, 16
    %v398 = vpop.permute.xlu0 %397
    %399 = vrot.lane.b32.xlu0 %v387, 16
    %v400 = vpop.permute.xlu0 %399
    %v401 = vsel %vm79, %v398, %v400
    %v402 = vsel %vm79, %v400, %v398
    %v403 = vsel %vm85, %v402, 0.0
    %v404 = vsel %vm86, %v401, 0.0
    %405 = vrot.lane.b32.xlu0 %v386, 15
    %v406 = vpop.permute.xlu0 %405
    %407 = vrot.lane.b32.xlu0 %v387, 15
    %v408 = vpop.permute.xlu0 %407
    %v409 = vsel %vm93, %v406, %v408
    %v410 = vsel %vm93, %v408, %v406
    %v411 = vsel %vm99, %v410, 0.0
    %v412 = vsel %vm100, %v409, 0.0
    %413 = vrot.lane.b32.xlu0 %v386, 1
    %v414 = vpop.permute.xlu0 %413
    %415 = vrot.lane.b32.xlu0 %v387, 1
    %v416 = vpop.permute.xlu0 %415
    %v417 = vsel %vm107, %v414, %v416
    %v418 = vsel %vm107, %v416, %v414
    %v419 = vsel %vm113, %v418, 0.0
    %v420 = vsel %vm114, %v417, 0.0
    %421 = vrot.lane.b32.xlu0 %v386, 127
    %v422 = vpop.permute.xlu0 %421
    %423 = vrot.lane.b32.xlu0 %v387, 127
    %v424 = vpop.permute.xlu0 %423
    %v425 = vsel %vm121, %v422, %v424
    %v426 = vsel %vm121, %v424, %v422
    %v427 = vsel %vm127, %v425, 0.0
    %v428 = vsel %vm128, %v426, 0.0
    %429 = vrot.lane.b32.xlu0 %v386, 113
    %v430 = vpop.permute.xlu0 %429
    %431 = vrot.lane.b32.xlu0 %v387, 113
    %v432 = vpop.permute.xlu0 %431
    %v433 = vsel %vm135, %v430, %v432
    %v434 = vsel %vm135, %v432, %v430
    %v435 = vsel %vm141, %v433, 0.0
    %v436 = vsel %vm142, %v434, 0.0
    %437 = vrot.lane.b32.xlu0 %v386, 112
    %v438 = vpop.permute.xlu0 %437
    %439 = vrot.lane.b32.xlu0 %v387, 112
    %v440 = vpop.permute.xlu0 %439
    %v441 = vsel %vm149, %v438, %v440
    %v442 = vsel %vm149, %v440, %v438
    %v443 = vsel %vm155, %v441, 0.0
    %v444 = vsel %vm156, %v442, 0.0
    %445 = vrot.lane.b32.xlu0 %v386, 111
    %v446 = vpop.permute.xlu0 %445
    %447 = vrot.lane.b32.xlu0 %v387, 111
    %v448 = vpop.permute.xlu0 %447
    %v449 = vsel %vm163, %v446, %v448
    %v450 = vsel %vm163, %v448, %v446
    %v451 = vsel %vm169, %v449, 0.0
    %v452 = vsel %vm170, %v450, 0.0
    %v453 = vpack.c.bf16 %v388, %v388
    %v454 = vunpack.c.l.bf16 %v453
    %v455 = vsub.f32 %v388, %v454
    %v456 = vpack.c.bf16 %v455, %v455
    %v457 = vpack.c.bf16 %v403, %v395
    %v458 = vpack.c.bf16 %v404, %v396
    %v459 = vpack.c.bf16 %v419, %v411
    %v460 = vpack.c.bf16 %v420, %v412
    %v461 = vpack.c.bf16 %v427, %v386
    %v462 = vpack.c.bf16 %v428, %v387
    %v463 = vpack.c.bf16 %v443, %v435
    %v464 = vpack.c.bf16 %v444, %v436
    %v465 = vpack.c.bf16 %v451, %v451
    %v466 = vpack.c.bf16 %v452, %v452
    %v467 = vunpack.c.l.bf16 %v457
    %v468 = vunpack.c.l.bf16 %v458
    %v469 = vunpack.c.h.bf16 %v457
    %v470 = vunpack.c.h.bf16 %v458
    %v471 = vunpack.c.l.bf16 %v459
    %v472 = vunpack.c.l.bf16 %v460
    %v473 = vunpack.c.h.bf16 %v459
    %v474 = vunpack.c.h.bf16 %v460
    %v475 = vunpack.c.l.bf16 %v461
    %v476 = vunpack.c.l.bf16 %v462
    %v477 = vunpack.c.h.bf16 %v461
    %v478 = vunpack.c.h.bf16 %v462
    %v479 = vunpack.c.l.bf16 %v463
    %v480 = vunpack.c.l.bf16 %v464
    %v481 = vunpack.c.h.bf16 %v463
    %v482 = vunpack.c.h.bf16 %v464
    %v483 = vunpack.c.l.bf16 %v465
    %v484 = vunpack.c.l.bf16 %v466
    %v485 = vsub.f32 %v395, %v467
    %v486 = vsub.f32 %v396, %v468
    %v487 = vsub.f32 %v403, %v469
    %v488 = vsub.f32 %v404, %v470
    %v489 = vsub.f32 %v411, %v471
    %v490 = vsub.f32 %v412, %v472
    %v491 = vsub.f32 %v419, %v473
    %v492 = vsub.f32 %v420, %v474
    %v493 = vsub.f32 %v386, %v475
    %v494 = vsub.f32 %v387, %v476
    %v495 = vsub.f32 %v427, %v477
    %v496 = vsub.f32 %v428, %v478
    %v497 = vsub.f32 %v435, %v479
    %v498 = vsub.f32 %v436, %v480
    %v499 = vsub.f32 %v443, %v481
    %v500 = vsub.f32 %v444, %v482
    %v501 = vsub.f32 %v451, %v483
    %v502 = vsub.f32 %v452, %v484
    %v503 = vpack.c.bf16 %v487, %v485
    %v504 = vpack.c.bf16 %v488, %v486
    %v505 = vpack.c.bf16 %v491, %v489
    %v506 = vpack.c.bf16 %v492, %v490
    %v507 = vpack.c.bf16 %v495, %v493
    %v508 = vpack.c.bf16 %v496, %v494
    %v509 = vpack.c.bf16 %v499, %v497
    %v510 = vpack.c.bf16 %v500, %v498
    %v511 = vpack.c.bf16 %v501, %v501
    %v512 = vpack.c.bf16 %v502, %v502
    %v514 = vsel %vm233, %v456, 0
    %v517 = vsel %vm237, %v465, 0
    %v520 = vsel %vm237, %v466, 0
    %522 = vmatprep.subr.bf16.mxu0 0
    %523 = vmatpush1.bf16.msra.mxu0 0
    %524 = vmatprep.subr.bf16.mxu0 0
    %525 = vmatpush1.bf16.msra.mxu0 0
    %526 = vmatprep.subr.bf16.mxu0 0
    %527 = vmatpush1.bf16.msra.mxu0 0
    %528 = vmatprep.subr.bf16.mxu0 %v520
    %529 = vmatpush1.bf16.msra.mxu0 %v517
    %530 = vmatprep.subr.bf16.mxu0 %v464
    %531 = vmatpush1.bf16.msra.mxu0 %v463
    %532 = vmatprep.subr.bf16.mxu0 %v462
    %533 = vmatpush1.bf16.msra.mxu0 %v461
    %534 = vmatprep.subr.bf16.mxu0 %v460
    %535 = vmatpush1.bf16.msra.mxu0 %v459
    %536 = vmatprep.subr.bf16.mxu0 %v458
    %537 = vmatpush1.bf16.msra.mxu0 %v457
    %538 = vmatprep.subr.bf16.mxu0 0
    %539 = vmatpush2.bf16.msra.mxu0 0
    %540 = vmatprep.subr.bf16.mxu0 0
    %541 = vmatpush2.bf16.msra.mxu0 0
    %542 = vmatprep.subr.bf16.mxu0 0
    %543 = vmatpush2.bf16.msra.mxu0 0
    %544 = vmatprep.subr.bf16.mxu0 0
    %545 = vmatpush2.bf16.msra.mxu0 0
    %546 = vmatprep.subr.bf16.mxu0 0
    %547 = vmatpush2.bf16.msra.mxu0 0
    %548 = vmatprep.subr.bf16.mxu0 0
    %549 = vmatpush2.bf16.msra.mxu0 0
    %550 = vmatprep.subr.bf16.mxu0 0
    %551 = vmatpush2.bf16.msra.mxu0 0
    %552 = vmatprep.subr.bf16.mxu0 0
    %553 = vmatpush2.bf16.msra.mxu0 0
    %554 = vmatprep.mubr.bf16.mxu0 0
    %555 = vmatmul.mubr.bf16.gmra.mxu0 %v514
    %v556 = vpop.f32.mrf.mxu0
    %v557 = vadd.f32 0.0, %v556
    %v558 = vpop.f32.mrf.mxu0
    %v559 = vadd.f32 0.0, %v558
    %v560 = vpop.f32.mrf.mxu0
    %v561 = vpop.f32.mrf.mxu0
    %562 = vdwg.mxu0
    %v564 = vsel %vm233, %v453, 0
    %566 = vmatprep.subr.bf16.mxu0 0
    %567 = vmatpush1.bf16.msra.mxu0 0
    %568 = vmatprep.subr.bf16.mxu0 0
    %569 = vmatpush1.bf16.msra.mxu0 0
    %570 = vmatprep.subr.bf16.mxu0 0
    %571 = vmatpush1.bf16.msra.mxu0 0
    %572 = vmatprep.subr.bf16.mxu0 %v520
    %573 = vmatpush1.bf16.msra.mxu0 %v517
    %574 = vmatprep.subr.bf16.mxu0 %v464
    %575 = vmatpush1.bf16.msra.mxu0 %v463
    %576 = vmatprep.subr.bf16.mxu0 %v462
    %577 = vmatpush1.bf16.msra.mxu0 %v461
    %578 = vmatprep.subr.bf16.mxu0 %v460
    %579 = vmatpush1.bf16.msra.mxu0 %v459
    %580 = vmatprep.subr.bf16.mxu0 %v458
    %581 = vmatpush1.bf16.msra.mxu0 %v457
    %582 = vmatprep.subr.bf16.mxu0 0
    %583 = vmatpush2.bf16.msra.mxu0 0
    %584 = vmatprep.subr.bf16.mxu0 0
    %585 = vmatpush2.bf16.msra.mxu0 0
    %586 = vmatprep.subr.bf16.mxu0 0
    %587 = vmatpush2.bf16.msra.mxu0 0
    %588 = vmatprep.subr.bf16.mxu0 0
    %589 = vmatpush2.bf16.msra.mxu0 0
    %590 = vmatprep.subr.bf16.mxu0 0
    %591 = vmatpush2.bf16.msra.mxu0 0
    %592 = vmatprep.subr.bf16.mxu0 0
    %593 = vmatpush2.bf16.msra.mxu0 0
    %594 = vmatprep.subr.bf16.mxu0 0
    %595 = vmatpush2.bf16.msra.mxu0 0
    %596 = vmatprep.subr.bf16.mxu0 0
    %597 = vmatpush2.bf16.msra.mxu0 0
    %598 = vmatprep.mubr.bf16.mxu0 0
    %599 = vmatmul.mubr.bf16.gmra.mxu0 %v564
    %v600 = vpop.f32.mrf.mxu0
    %v601 = vadd.f32 %v557, %v600
    %v602 = vpop.f32.mrf.mxu0
    %v603 = vadd.f32 %v559, %v602
    %v604 = vpop.f32.mrf.mxu0
    %v605 = vpop.f32.mrf.mxu0
    %606 = vdwg.mxu0
    %v608 = vsel %vm237, %v511, 0
    %v611 = vsel %vm237, %v512, 0
    %613 = vmatprep.subr.bf16.mxu0 0
    %614 = vmatpush1.bf16.msra.mxu0 0
    %615 = vmatprep.subr.bf16.mxu0 0
    %616 = vmatpush1.bf16.msra.mxu0 0
    %617 = vmatprep.subr.bf16.mxu0 0
    %618 = vmatpush1.bf16.msra.mxu0 0
    %619 = vmatprep.subr.bf16.mxu0 %v611
    %620 = vmatpush1.bf16.msra.mxu0 %v608
    %621 = vmatprep.subr.bf16.mxu0 %v510
    %622 = vmatpush1.bf16.msra.mxu0 %v509
    %623 = vmatprep.subr.bf16.mxu0 %v508
    %624 = vmatpush1.bf16.msra.mxu0 %v507
    %625 = vmatprep.subr.bf16.mxu0 %v506
    %626 = vmatpush1.bf16.msra.mxu0 %v505
    %627 = vmatprep.subr.bf16.mxu0 %v504
    %628 = vmatpush1.bf16.msra.mxu0 %v503
    %629 = vmatprep.subr.bf16.mxu0 0
    %630 = vmatpush2.bf16.msra.mxu0 0
    %631 = vmatprep.subr.bf16.mxu0 0
    %632 = vmatpush2.bf16.msra.mxu0 0
    %633 = vmatprep.subr.bf16.mxu0 0
    %634 = vmatpush2.bf16.msra.mxu0 0
    %635 = vmatprep.subr.bf16.mxu0 0
    %636 = vmatpush2.bf16.msra.mxu0 0
    %637 = vmatprep.subr.bf16.mxu0 0
    %638 = vmatpush2.bf16.msra.mxu0 0
    %639 = vmatprep.subr.bf16.mxu0 0
    %640 = vmatpush2.bf16.msra.mxu0 0
    %641 = vmatprep.subr.bf16.mxu0 0
    %642 = vmatpush2.bf16.msra.mxu0 0
    %643 = vmatprep.subr.bf16.mxu0 0
    %644 = vmatpush2.bf16.msra.mxu0 0
    %645 = vmatprep.mubr.bf16.mxu0 0
    %646 = vmatmul.mubr.bf16.gmra.mxu0 %v564
    %v647 = vpop.f32.mrf.mxu0
    %v648 = vadd.f32 0.0, %v647
    %v649 = vpop.f32.mrf.mxu0
    %v650 = vadd.f32 0.0, %v649
    %v651 = vpop.f32.mrf.mxu0
    %v652 = vpop.f32.mrf.mxu0
    %653 = vdwg.mxu0
    %v654 = vadd.f32 %v601, %v648
    %v655 = vadd.f32 %v603, %v650
    %v656 = vld [vmem:[%s4] sm:$0xff]
    %658 = vset.pattern.permute.xlu0 0
    %659 = vperm.xlu0 %658, %v656
    %v660 = vpop.permute.xlu0 %659
    %v662 = vadd.f32 %v654, %v660
    %v663 = vadd.f32 %v655, %v660
    %v664 = vmax.f32 %v662, 0.0
    %v665 = vmax.f32 %v663, 0.0
    %v666 = vld [vmem:[#allocation2] sm:$0xff]
    %v667 = vpack.c.bf16 %v666, %v666
    %v668 = vunpack.c.l.bf16 %v667
    %v669 = vsub.f32 %v666, %v668
    %v670 = vpack.c.bf16 %v669, %v669
    %v671 = vpack.c.bf16 %v664, %v664
    %v672 = vpack.c.bf16 %v665, %v665
    %v673 = vunpack.c.l.bf16 %v671
    %v674 = vunpack.c.l.bf16 %v672
    %v675 = vsub.f32 %v664, %v673
    %v676 = vsub.f32 %v665, %v674
    %v677 = vpack.c.bf16 %v675, %v675
    %v678 = vpack.c.bf16 %v676, %v676
    %vm679 = vcmask 64512
    %v681 = vsel %vm679, %v670, 0
    %v684 = vsel %vm237, %v671, 0
    %v687 = vsel %vm237, %v672, 0
    %689 = vmatprep.subr.bf16.mxu0 0
    %690 = vmatpush1.bf16.msra.mxu0 0
    %691 = vmatprep.subr.bf16.mxu0 0
    %692 = vmatpush1.bf16.msra.mxu0 0
    %693 = vmatprep.subr.bf16.mxu0 0
    %694 = vmatpush1.bf16.msra.mxu0 0
    %695 = vmatprep.subr.bf16.mxu0 0
    %696 = vmatpush1.bf16.msra.mxu0 0
    %697 = vmatprep.subr.bf16.mxu0 0
    %698 = vmatpush1.bf16.msra.mxu0 0
    %699 = vmatprep.subr.bf16.mxu0 0
    %700 = vmatpush1.bf16.msra.mxu0 0
    %701 = vmatprep.subr.bf16.mxu0 0
    %702 = vmatpush1.bf16.msra.mxu0 0
    %703 = vmatprep.subr.bf16.mxu0 %v687
    %704 = vmatpush1.bf16.msra.mxu0 %v684
    %705 = vmatprep.subr.bf16.mxu0 0
    %706 = vmatpush2.bf16.msra.mxu0 0
    %707 = vmatprep.subr.bf16.mxu0 0
    %708 = vmatpush2.bf16.msra.mxu0 0
    %709 = vmatprep.subr.bf16.mxu0 0
    %710 = vmatpush2.bf16.msra.mxu0 0
    %711 = vmatprep.subr.bf16.mxu0 0
    %712 = vmatpush2.bf16.msra.mxu0 0
    %713 = vmatprep.subr.bf16.mxu0 0
    %714 = vmatpush2.bf16.msra.mxu0 0
    %715 = vmatprep.subr.bf16.mxu0 0
    %716 = vmatpush2.bf16.msra.mxu0 0
    %717 = vmatprep.subr.bf16.mxu0 0
    %718 = vmatpush2.bf16.msra.mxu0 0
    %719 = vmatprep.subr.bf16.mxu0 0
    %720 = vmatpush2.bf16.msra.mxu0 0
    %721 = vmatprep.mubr.bf16.mxu0 0
    %722 = vmatmul.mubr.bf16.gmra.mxu0 %v681
    %v723 = vpop.f32.mrf.mxu0
    %v724 = vadd.f32 0.0, %v723
    %v725 = vpop.f32.mrf.mxu0
    %v726 = vadd.f32 0.0, %v725
    %v727 = vpop.f32.mrf.mxu0
    %v728 = vpop.f32.mrf.mxu0
    %729 = vdwg.mxu0
    %v731 = vsel %vm679, %v667, 0
    %733 = vmatprep.subr.bf16.mxu0 0
    %734 = vmatpush1.bf16.msra.mxu0 0
    %735 = vmatprep.subr.bf16.mxu0 0
    %736 = vmatpush1.bf16.msra.mxu0 0
    %737 = vmatprep.subr.bf16.mxu0 0
    %738 = vmatpush1.bf16.msra.mxu0 0
    %739 = vmatprep.subr.bf16.mxu0 0
    %740 = vmatpush1.bf16.msra.mxu0 0
    %741 = vmatprep.subr.bf16.mxu0 0
    %742 = vmatpush1.bf16.msra.mxu0 0
    %743 = vmatprep.subr.bf16.mxu0 0
    %744 = vmatpush1.bf16.msra.mxu0 0
    %745 = vmatprep.subr.bf16.mxu0 0
    %746 = vmatpush1.bf16.msra.mxu0 0
    %747 = vmatprep.subr.bf16.mxu0 %v687
    %748 = vmatpush1.bf16.msra.mxu0 %v684
    %749 = vmatprep.subr.bf16.mxu0 0
    %750 = vmatpush2.bf16.msra.mxu0 0
    %751 = vmatprep.subr.bf16.mxu0 0
    %752 = vmatpush2.bf16.msra.mxu0 0
    %753 = vmatprep.subr.bf16.mxu0 0
    %754 = vmatpush2.bf16.msra.mxu0 0
    %755 = vmatprep.subr.bf16.mxu0 0
    %756 = vmatpush2.bf16.msra.mxu0 0
    %757 = vmatprep.subr.bf16.mxu0 0
    %758 = vmatpush2.bf16.msra.mxu0 0
    %759 = vmatprep.subr.bf16.mxu0 0
    %760 = vmatpush2.bf16.msra.mxu0 0
    %761 = vmatprep.subr.bf16.mxu0 0
    %762 = vmatpush2.bf16.msra.mxu0 0
    %763 = vmatprep.subr.bf16.mxu0 0
    %764 = vmatpush2.bf16.msra.mxu0 0
    %765 = vmatprep.mubr.bf16.mxu0 0
    %766 = vmatmul.mubr.bf16.gmra.mxu0 %v731
    %v767 = vpop.f32.mrf.mxu0
    %v768 = vadd.f32 %v724, %v767
    %v769 = vpop.f32.mrf.mxu0
    %v770 = vadd.f32 %v726, %v769
    %v771 = vpop.f32.mrf.mxu0
    %v772 = vpop.f32.mrf.mxu0
    %773 = vdwg.mxu0
    %v775 = vsel %vm237, %v677, 0
    %v778 = vsel %vm237, %v678, 0
    %780 = vmatprep.subr.bf16.mxu0 0
    %781 = vmatpush1.bf16.msra.mxu0 0
    %782 = vmatprep.subr.bf16.mxu0 0
    %783 = vmatpush1.bf16.msra.mxu0 0
    %784 = vmatprep.subr.bf16.mxu0 0
    %785 = vmatpush1.bf16.msra.mxu0 0
    %786 = vmatprep.subr.bf16.mxu0 0
    %787 = vmatpush1.bf16.msra.mxu0 0
    %788 = vmatprep.subr.bf16.mxu0 0
    %789 = vmatpush1.bf16.msra.mxu0 0
    %790 = vmatprep.subr.bf16.mxu0 0
    %791 = vmatpush1.bf16.msra.mxu0 0
    %792 = vmatprep.subr.bf16.mxu0 0
    %793 = vmatpush1.bf16.msra.mxu0 0
    %794 = vmatprep.subr.bf16.mxu0 %v778
    %795 = vmatpush1.bf16.msra.mxu0 %v775
    %796 = vmatprep.subr.bf16.mxu0 0
    %797 = vmatpush2.bf16.msra.mxu0 0
    %798 = vmatprep.subr.bf16.mxu0 0
    %799 = vmatpush2.bf16.msra.mxu0 0
    %800 = vmatprep.subr.bf16.mxu0 0
    %801 = vmatpush2.bf16.msra.mxu0 0
    %802 = vmatprep.subr.bf16.mxu0 0
    %803 = vmatpush2.bf16.msra.mxu0 0
    %804 = vmatprep.subr.bf16.mxu0 0
    %805 = vmatpush2.bf16.msra.mxu0 0
    %806 = vmatprep.subr.bf16.mxu0 0
    %807 = vmatpush2.bf16.msra.mxu0 0
    %808 = vmatprep.subr.bf16.mxu0 0
    %809 = vmatpush2.bf16.msra.mxu0 0
    %810 = vmatprep.subr.bf16.mxu0 0
    %811 = vmatpush2.bf16.msra.mxu0 0
    %812 = vmatprep.mubr.bf16.mxu0 0
    %813 = vmatmul.mubr.bf16.gmra.mxu0 %v731
    %v814 = vpop.f32.mrf.mxu0
    %v815 = vadd.f32 0.0, %v814
    %v816 = vpop.f32.mrf.mxu0
    %v817 = vadd.f32 0.0, %v816
    %v818 = vpop.f32.mrf.mxu0
    %v819 = vpop.f32.mrf.mxu0
    %820 = vdwg.mxu0
    %v821 = vadd.f32 %v768, %v815
    %v822 = vadd.f32 %v770, %v817
    %v823 = vld [vmem:[%s6] sm:$0xff]
    %825 = vset.pattern.permute.xlu0 0
    %826 = vperm.xlu0 %825, %v823
    %v827 = vpop.permute.xlu0 %826
    %v829 = vadd.f32 %v821, %v827
    %v830 = vadd.f32 %v822, %v827
    %v831 = vadd.f32 %v829, %v57
    %v832 = vadd.f32 %v830, %v58
    %833 = vst [vmem:[#allocation7] sm:$0xff] %v831
    %834 = vst [vmem:[#allocation7 + $0x8] sm:$0xff] %v832
    // Predicated region
    $region42: #{tpu_custom_call.1} parent=1 // pred_check
      _
    $region43: #{tpu_custom_call.1} parent=1 // pred_check_branch
      %836 = sbr.rel (0) target = $region45
    $region44: #{tpu_custom_call.1} parent=1 // pred_region
      %s838 = ssub.s32 256, 256
      %839 = vsyncadd [#allocation4], %s838
      %s841 = sshll.u32 [#allocation7], 4
      %s842 = int_to_ptr.vmem [resolvable:$true] %s841
      %844 = dma.vmem_to_hbm [thread:$0]  %s842, 256, %s8, [#allocation4]
    $region45: #{tpu_custom_call.1} parent=1 // pred_fallthru
      _
    // Predicated region
    $region46: #{tpu_custom_call.1} parent=1 // pred_check
      _
    $region47: #{tpu_custom_call.1} parent=1 // pred_check_branch
      %846 = sbr.rel (0) target = $region49
    $region48: #{tpu_custom_call.1} parent=1 // pred_region
      %847 = dma.done [#allocation4], 256
    $region49: #{tpu_custom_call.1} parent=1 // pred_fallthru
      _
    %848 = vsyncpa [#allocation3], 1
    %849 = vsyncpa [#allocation6], 1
    %850 = vsyncpa [#allocation4], 1

</llo_original>
